<compile_context>
chip_gen: v7x
topology: tpu7x:2x2x1
jax: 0.10.0
libtpu: 0.0.40
codegen_flags: <defaults>
</compile_context>

<pallas_src>
import jax
import jax.numpy as jnp
from jax.experimental import pallas as pl
from jax.experimental.pallas import tpu as pltpu


def _round_up(x, m):
    return -(-x // m) * m


# ----------------------------------------------------------------------------
# One-hot MXU path (small / mid vocab): logits tile = onehot(tok) @ emb
# ----------------------------------------------------------------------------
def _logits_onehot_kernel(tok_ref, emb_ref, logits_ref):
    tile_n, v = logits_ref.shape
    lane = jax.lax.broadcasted_iota(jnp.int32, (tile_n, v), 1)
    onehot = (lane == tok_ref[...]).astype(emb_ref.dtype)          # (tile_n, V)
    logits_ref[...] = jnp.dot(onehot, emb_ref[...],
                              preferred_element_type=jnp.float32)


def _make_loss_onehot_kernel(n_valid):
    def kernel(tok_ref, tgt_ref, emb_ref, logits_ref, loss_ref):
        i = pl.program_id(0)
        tile_n, v = logits_ref.shape
        base = pl.multiple_of(i * tile_n, tile_n)
        lane = jax.lax.broadcasted_iota(jnp.int32, (tile_n, v), 1)

        onehot = (lane == tok_ref[...]).astype(jnp.float32)
        logits = jnp.dot(onehot, emb_ref[...],
                         preferred_element_type=jnp.float32)
        logits_ref[...] = logits

        # Vectorized target pick + logsumexp over the whole tile.
        picked = jnp.sum(jnp.where(lane == tgt_ref[...], logits, 0.0),
                         axis=-1, keepdims=True)
        m = jnp.max(logits, axis=-1, keepdims=True)
        lse = m + jnp.log(jnp.sum(jnp.exp(logits - m), axis=-1, keepdims=True))

        # Mask rows beyond the real N (row padding) so sum / N == mean.
        row_id = base + jax.lax.broadcasted_iota(jnp.int32, (tile_n, 1), 0)
        loss_ref[...] = jnp.where(row_id < n_valid, lse - picked, 0.0)

    return kernel


# ----------------------------------------------------------------------------
# Gather fallback (large but still VMEM-resident vocab): unrolled row gather.
# ----------------------------------------------------------------------------
def _logits_gather_kernel(tok_smem, emb_ref, logits_ref):
    i = pl.program_id(0)
    tile_n, _ = logits_ref.shape
    base = pl.multiple_of(i * tile_n, tile_n)

    def gather_row(r, carry):
        t = tok_smem[base + r]                                     # SMEM scalar
        logits_ref[pl.ds(r, 1), :] = emb_ref[pl.ds(t, 1), :]       # (1, V) row
        return carry

    jax.lax.fori_loop(0, tile_n, gather_row, 0, unroll=8)


def _make_loss_gather_kernel(n_valid):
    def kernel(tok_smem, tgt_ref, emb_ref, logits_ref, loss_ref):
        i = pl.program_id(0)
        tile_n, v = logits_ref.shape
        base = pl.multiple_of(i * tile_n, tile_n)

        def gather_row(r, carry):
            t = tok_smem[base + r]
            logits_ref[pl.ds(r, 1), :] = emb_ref[pl.ds(t, 1), :]
            return carry

        jax.lax.fori_loop(0, tile_n, gather_row, 0, unroll=8)

        logits = logits_ref[...]
        lane = jax.lax.broadcasted_iota(jnp.int32, (tile_n, v), 1)
        picked = jnp.sum(jnp.where(lane == tgt_ref[...], logits, 0.0),
                         axis=-1, keepdims=True)
        m = jnp.max(logits, axis=-1, keepdims=True)
        lse = m + jnp.log(jnp.sum(jnp.exp(logits - m), axis=-1, keepdims=True))

        row_id = base + jax.lax.broadcasted_iota(jnp.int32, (tile_n, 1), 0)
        loss_ref[...] = jnp.where(row_id < n_valid, lse - picked, 0.0)

    return kernel


# ----------------------------------------------------------------------------
# Wrapper
# ----------------------------------------------------------------------------
def bigram_forward(x, emb, targets=None, *, tile_n=512, onehot_max_vocab=2048):
    """x: [B, T] int tokens, emb: [V, V] f32 table. Mirrors Bigram.forward."""
    B, T = x.shape
    V = emb.shape[0]
    emb = emb.astype(jnp.float32)
    N = B * T

    # Row tile: multiple of 8 (sublane), big enough to amortize per-step
    # overhead, but never over-padding tiny inputs.
    tile_n = int(max(8, min(_round_up(int(tile_n), 8), _round_up(N, 8))))
    n_tiles = int(pl.cdiv(N, tile_n))
    n_pad = n_tiles * tile_n

    tok = jnp.pad(x.reshape(N).astype(jnp.int32), (0, n_pad - N))
    tok_col = tok.reshape(n_pad, 1)

    use_onehot = V <= onehot_max_vocab

    # VMEM budget: clamp to this generation's physical capacity minus headroom.
    # (v7x: 64 MiB/TensorCore; v5e/v6e: 128 MiB.)
    try:
        cap = int(pltpu.get_tpu_info().vmem_capacity_bytes)
    except Exception:  # pragma: no cover - conservative fallback
        cap = 64 * 2**20
    needed = (2 * V * V * 4             # resident table (double-buffered worst case)
              + 2 * tile_n * V * 4      # logits out tile, double-buffered
              + 8 * tile_n * 4          # tok/tgt column tiles + loss tile
              + (2 << 20))              # slack
    vmem_limit = int(min(max(needed, 32 * 2**20), cap - 16 * 2**20))

    cparams = pltpu.CompilerParams(
        # Row tiles are independent -> shard across TensorCores (pays off when
        # n_tiles >= 2; each core keeps its own copy of the resident table).
        dimension_semantics=("parallel",),
        vmem_limit_bytes=vmem_limit,
    )
    cost = pl.CostEstimate(
        flops=int(2 * n_pad * V * V) if use_onehot else 0,
        transcendentals=int(n_pad * V) if targets is not None else 0,
        bytes_accessed=int(V * V * 4 + n_pad * V * 4 + n_pad * 8),
    )

    if targets is None:
        if use_onehot:
            logits = pl.pallas_call(
                _logits_onehot_kernel,
                grid=(n_tiles,),
                in_specs=[pl.BlockSpec((tile_n, 1), lambda i: (i, 0)),   # tokens
                          pl.BlockSpec((V, V), lambda i: (0, 0))],       # resident
                out_specs=pl.BlockSpec((tile_n, V), lambda i: (i, 0)),
                out_shape=jax.ShapeDtypeStruct((n_pad, V), jnp.float32),
                compiler_params=cparams,
                cost_estimate=cost,
            )(tok_col, emb)
        else:
            logits = pl.pallas_call(
                _logits_gather_kernel,
                grid_spec=pltpu.PrefetchScalarGridSpec(
                    num_scalar_prefetch=1,
                    grid=(n_tiles,),
                    in_specs=[pl.BlockSpec((V, V), lambda i, tok: (0, 0))],
                    out_specs=pl.BlockSpec((tile_n, V), lambda i, tok: (i, 0)),
                ),
                out_shape=jax.ShapeDtypeStruct((n_pad, V), jnp.float32),
                compiler_params=cparams,
                cost_estimate=cost,
            )(tok, emb)
        return logits[:N].reshape(B, T, V)

    tgt = jnp.pad(targets.reshape(N).astype(jnp.int32), (0, n_pad - N))
    tgt_col = tgt.reshape(n_pad, 1)

    if use_onehot:
        logits, per_row = pl.pallas_call(
            _make_loss_onehot_kernel(N),
            grid=(n_tiles,),
            in_specs=[pl.BlockSpec((tile_n, 1), lambda i: (i, 0)),       # tokens
                      pl.BlockSpec((tile_n, 1), lambda i: (i, 0)),       # targets
                      pl.BlockSpec((V, V), lambda i: (0, 0))],           # resident
            out_specs=(pl.BlockSpec((tile_n, V), lambda i: (i, 0)),
                       pl.BlockSpec((tile_n, 1), lambda i: (i, 0))),
            out_shape=(jax.ShapeDtypeStruct((n_pad, V), jnp.float32),
                       jax.ShapeDtypeStruct((n_pad, 1), jnp.float32)),
            compiler_params=cparams,
            cost_estimate=cost,
        )(tok_col, tgt_col, emb)
    else:
        logits, per_row = pl.pallas_call(
            _make_loss_gather_kernel(N),
            grid_spec=pltpu.PrefetchScalarGridSpec(
                num_scalar_prefetch=1,
                grid=(n_tiles,),
                in_specs=[pl.BlockSpec((tile_n, 1), lambda i, tok: (i, 0)),
                          pl.BlockSpec((V, V), lambda i, tok: (0, 0))],
                out_specs=(pl.BlockSpec((tile_n, V), lambda i, tok: (i, 0)),
                           pl.BlockSpec((tile_n, 1), lambda i, tok: (i, 0))),
            ),
            out_shape=(jax.ShapeDtypeStruct((n_pad, V), jnp.float32),
                       jax.ShapeDtypeStruct((n_pad, 1), jnp.float32)),
            compiler_params=cparams,
            cost_estimate=cost,
        )(tok, tgt_col, emb)

    loss = jnp.sum(per_row) / N          # padded rows contribute 0 -> exact mean
    return logits[:N], loss              # flattened (B*T, V) logits, like the module


if __name__ == "__main__":
    B, T, V = 2, 8, 128
    key = jax.random.PRNGKey(0)
    k_emb, k_x, k_t = jax.random.split(key, 3)

    # nn.Embedding(vocab, vocab) init ~ N(0, 1); deterministic inputs.
    emb = jax.random.normal(k_emb, (V, V), dtype=jnp.float32)
    x = jax.random.randint(k_x, (B, T), 0, V, dtype=jnp.int32)
    targets = jax.random.randint(k_t, (B, T), 0, V, dtype=jnp.int32)

    logits_only = bigram_forward(x, emb)                 # targets=None path
    logits, loss = bigram_forward(x, emb, targets)       # (logits, loss) path
    jax.block_until_ready((logits_only, logits, loss))

    # Pure-JAX reference.
    ref_logits = emb[x].reshape(B * T, V)
    lse = jax.scipy.special.logsumexp(ref_logits, axis=-1)
    ref_loss = jnp.mean(lse - ref_logits[jnp.arange(B * T), targets.reshape(-1)])

    assert logits_only.shape == (B, T, V)
    assert jnp.allclose(logits_only.reshape(B * T, V), ref_logits, atol=1e-5)
    assert jnp.allclose(logits, ref_logits, atol=1e-5)
    assert jnp.allclose(loss, ref_loss, atol=1e-5)

    print("KERNEL_OK")
</pallas_src>

<mosaic_0001>
module attributes {stable_mosaic.version = 11 : i64} {
  func.func @_logits_onehot_kernel(%arg0: i32, %arg1: memref<16x1xi32, #tpu.memory_space<vmem>>, %arg2: memref<128x128xf32, #tpu.memory_space<vmem>>, %arg3: memref<16x128xf32, #tpu.memory_space<vmem>>) attributes {dimension_semantics = [#tpu.dimension_semantics<parallel>], iteration_bounds = array<i64: 1>, scalar_prefetch = 0 : i64, scratch_operands = 0 : i64, tpu.core_type = #tpu.core_type<tc>, window_params = [{transform_indices = @transform_0, window_bounds = array<i64: 16, 1>}, {pipeline_mode = #tpu.pipeline_mode<synchronous>, transform_indices = @transform_1, window_bounds = array<i64: 128, 128>}, {transform_indices = @transform_2, window_bounds = array<i64: 16, 128>}]} {
    %0 = tpu.iota {dimensions = array<i32: 1>} : vector<16x128xi32>
    %c0 = arith.constant 0 : index
    %c0_0 = arith.constant 0 : index
    %1 = vector.load %arg1[%c0, %c0_0] : memref<16x1xi32, #tpu.memory_space<vmem>>, vector<16x1xi32>
    %2 = vector.broadcast %1 : vector<16x1xi32> to vector<16x128xi32>
    %3 = arith.cmpi eq, %0, %2 : vector<16x128xi32>
    %4 = arith.extui %3 : vector<16x128xi1> to vector<16x128xi32>
    %5 = arith.sitofp %4 : vector<16x128xi32> to vector<16x128xf32>
    %c0_1 = arith.constant 0 : index
    %c0_2 = arith.constant 0 : index
    %6 = vector.load %arg2[%c0_1, %c0_2] : memref<128x128xf32, #tpu.memory_space<vmem>>, vector<128x128xf32>
    %cst = arith.constant dense<0.000000e+00> : vector<16x128xf32>
    %7 = tpu.matmul %5, %6, %cst {dimension_numbers = #tpu.dot_dimension_numbers<[1], [0], [0], [1], [0, 0, 1, 1], [], []>} : vector<16x128xf32>, vector<128x128xf32>, vector<16x128xf32> -> vector<16x128xf32>
    %c0_3 = arith.constant 0 : index
    %c0_4 = arith.constant 0 : index
    %8 = vector.load %arg3[%c0_3, %c0_4] : memref<16x128xf32, #tpu.memory_space<vmem>>, vector<16x128xf32>
    tpu.vector_store %arg3[%c0_3, %c0_4], %7 {strides = array<i32>} : memref<16x128xf32, #tpu.memory_space<vmem>>, vector<16x128xf32>,
    return
  }
  func.func @transform_0(%arg0: i32) -> (i32, i32) {
    %c0_i32 = arith.constant 0 : i32
    %c0_i32_0 = arith.constant 0 : i32
    return %arg0, %c0_i32 : i32, i32
  }
  func.func @transform_1(%arg0: i32) -> (i32, i32) {
    %c0_i32 = arith.constant 0 : i32
    %c0_i32_0 = arith.constant 0 : i32
    %c0_i32_1 = arith.constant 0 : i32
    return %c0_i32, %c0_i32_0 : i32, i32
  }
  func.func @transform_2(%arg0: i32) -> (i32, i32) {
    %c0_i32 = arith.constant 0 : i32
    %c0_i32_0 = arith.constant 0 : i32
    return %arg0, %c0_i32 : i32, i32
  }
}

</mosaic_0001>

<llo_original>
// kernel: tpu_custom_call.1
$region0: #{tpu_custom_call.1}
  #allocation0 [shape = 'u32[]', space=smem, size = 0x4, offset = 0x4, fixed_abs, tag = 'smem constant byte address 0x4 - core index']
  #allocation1 [shape = 'u32[144,128]{1,0:T(1,128)}', space=vmem, size = 0x12000, scoped, tag = 'internal scratch']
  %s0 = inlined_call_operand.vmem [shape: s32[16,1], index: 0, kind: input, shape index: {}]
  %s1 = inlined_call_operand.hbm [shape: f32[128,128], index: 1, kind: input, shape index: {}]
  %s2 = inlined_call_operand.hbm [shape: f32[16,128], index: 2, kind: output, shape index: {}]
  %s3 = sld [smem:[#allocation0]]
  $region22: #{tpu_custom_call.1} parent=0
    _
  %s5 = ssub.s32 1, %s3
  %s6 = scalar_select 0, %s5, %s3
  $region1: #{tpu_custom_call.1} parent=0
    #allocation2 [shape = 'u8[65536]{0}', space=vmem, size = 0x10000, scoped, tag = 'input window, operand 1, single buffered']
    #allocation3 [shape = 's32[1]{0}', space=sflag, size = 0x4, scoped, tag = 'scoped memory for tpu_custom_call.1']
    #allocation4 [shape = 's32[1]{0}', space=sflag, size = 0x4, scoped, tag = 'scoped memory for tpu_custom_call.1']
    #allocation5 [shape = 'u8[8192]{0}', space=vmem, size = 0x2000, scoped, tag = 'output window, operand 0, single buffered']
    %7 = vsyncpa [#allocation3], 0
    %8 = vsyncpa [#allocation4], 0
    // Predicated region
    $region2: #{tpu_custom_call.1} parent=1 // pred_check
      _
    $region3: #{tpu_custom_call.1} parent=1 // pred_check_branch
      %10 = sbr.rel (0) target = $region5
    $region4: #{tpu_custom_call.1} parent=1 // pred_region
      _
    $region5: #{tpu_custom_call.1} parent=1 // pred_fallthru
      _
    // Predicated region
    $region6: #{tpu_custom_call.1} parent=1 // pred_check
      _
    $region7: #{tpu_custom_call.1} parent=1 // pred_check_branch
      %12 = sbr.rel (0) target = $region9
    $region8: #{tpu_custom_call.1} parent=1 // pred_region
      %s14 = ssub.s32 2048, 2048
      %15 = vsyncadd [#allocation3], %s14
      %s16 = sshll.u32 [#allocation2], 4
      %s17 = int_to_ptr.vmem [resolvable:$true] %s16
      %22 = dma.hbm_to_vmem [thread:$0]  %s1, 2048, %s17, [#allocation3], 128, 128, 8
    $region9: #{tpu_custom_call.1} parent=1 // pred_fallthru
      _
    // Predicated region
    $region10: #{tpu_custom_call.1} parent=1 // pred_check
      _
    $region11: #{tpu_custom_call.1} parent=1 // pred_check_branch
      %24 = sbr.rel (0) target = $region13
    $region12: #{tpu_custom_call.1} parent=1 // pred_region
      %25 = dma.done [#allocation3], 2048
    $region13: #{tpu_custom_call.1} parent=1 // pred_fallthru
      _
    %v26 = vlaneseq
    %v27 = vand.u32 %v26, 127
    %v28 = vld [vmem:[%s0] sm:$0xff]
    %v29 = vld [vmem:[%s0 + $0x8] sm:$0xff]
    %30 = vset.pattern.permute.xlu0 0
    %31 = vperm.xlu0 %30, %v28
    %v32 = vpop.permute.xlu0 %31
    %33 = vset.pattern.permute.xlu0 0
    %34 = vperm.xlu0 %33, %v29
    %v35 = vpop.permute.xlu0 %34
    %vm36 = vcmp.eq.s32.totalorder %v27, %v32
    %vm37 = vcmp.eq.s32.totalorder %v27, %v35
    %v38 = vsel %vm36, 1, 0
    %v39 = vsel %vm37, 1, 0
    %v40 = vcvt.s32.f32 %v38
    %v41 = vcvt.s32.f32 %v39
    %v42 = vld [vmem:[#allocation2] sm:$0xff]
    %v43 = vld [vmem:[#allocation2 + $0x8] sm:$0xff]
    %v44 = vld [vmem:[#allocation2 + $0x10] sm:$0xff]
    %v45 = vld [vmem:[#allocation2 + $0x18] sm:$0xff]
    %v46 = vld [vmem:[#allocation2 + $0x20] sm:$0xff]
    %v47 = vld [vmem:[#allocation2 + $0x28] sm:$0xff]
    %v48 = vld [vmem:[#allocation2 + $0x30] sm:$0xff]
    %v49 = vld [vmem:[#allocation2 + $0x38] sm:$0xff]
    %v50 = vld [vmem:[#allocation2 + $0x40] sm:$0xff]
    %v51 = vld [vmem:[#allocation2 + $0x48] sm:$0xff]
    %v52 = vld [vmem:[#allocation2 + $0x50] sm:$0xff]
    %v53 = vld [vmem:[#allocation2 + $0x58] sm:$0xff]
    %v54 = vld [vmem:[#allocation2 + $0x60] sm:$0xff]
    %v55 = vld [vmem:[#allocation2 + $0x68] sm:$0xff]
    %v56 = vld [vmem:[#allocation2 + $0x70] sm:$0xff]
    %v57 = vld [vmem:[#allocation2 + $0x78] sm:$0xff]
    %58 = vmatprep.subr.mxu0 0.0
    %59 = vmatpush1.msra.mxu0 %v42
    %60 = vmatprep.subr.mxu0 0.0
    %61 = vmatpush1.msra.mxu0 %v43
    %62 = vmatprep.subr.mxu0 0.0
    %63 = vmatpush1.msra.mxu0 %v44
    %64 = vmatprep.subr.mxu0 0.0
    %65 = vmatpush1.msra.mxu0 %v45
    %66 = vmatprep.subr.mxu0 0.0
    %67 = vmatpush1.msra.mxu0 %v46
    %68 = vmatprep.subr.mxu0 0.0
    %69 = vmatpush1.msra.mxu0 %v47
    %70 = vmatprep.subr.mxu0 0.0
    %71 = vmatpush1.msra.mxu0 %v48
    %72 = vmatprep.subr.mxu0 0.0
    %73 = vmatpush1.msra.mxu0 %v49
    %74 = vmatprep.subr.mxu0 0.0
    %75 = vmatpush1.msra.mxu0 %v50
    %76 = vmatprep.subr.mxu0 0.0
    %77 = vmatpush1.msra.mxu0 %v51
    %78 = vmatprep.subr.mxu0 0.0
    %79 = vmatpush1.msra.mxu0 %v52
    %80 = vmatprep.subr.mxu0 0.0
    %81 = vmatpush1.msra.mxu0 %v53
    %82 = vmatprep.subr.mxu0 0.0
    %83 = vmatpush1.msra.mxu0 %v54
    %84 = vmatprep.subr.mxu0 0.0
    %85 = vmatpush1.msra.mxu0 %v55
    %86 = vmatprep.subr.mxu0 0.0
    %87 = vmatpush1.msra.mxu0 %v56
    %88 = vmatprep.subr.mxu0 0.0
    %89 = vmatpush1.msra.mxu0 %v57
    %90 = vmatprep.subr.mxu0 0.0
    %91 = vmatpush1.msra.mxu0 0.0
    %92 = vmatprep.subr.mxu0 0.0
    %93 = vmatpush1.msra.mxu0 0.0
    %94 = vmatprep.subr.mxu0 0.0
    %95 = vmatpush1.msra.mxu0 0.0
    %96 = vmatprep.subr.mxu0 0.0
    %97 = vmatpush1.msra.mxu0 0.0
    %98 = vmatprep.subr.mxu0 0.0
    %99 = vmatpush1.msra.mxu0 0.0
    %100 = vmatprep.subr.mxu0 0.0
    %101 = vmatpush1.msra.mxu0 0.0
    %102 = vmatprep.subr.mxu0 0.0
    %103 = vmatpush1.msra.mxu0 0.0
    %104 = vmatprep.subr.mxu0 0.0
    %105 = vmatpush1.msra.mxu0 0.0
    %106 = vmatprep.subr.mxu0 0.0
    %107 = vmatpush1.msra.mxu0 0.0
    %108 = vmatprep.subr.mxu0 0.0
    %109 = vmatpush1.msra.mxu0 0.0
    %110 = vmatprep.subr.mxu0 0.0
    %111 = vmatpush1.msra.mxu0 0.0
    %112 = vmatprep.subr.mxu0 0.0
    %113 = vmatpush1.msra.mxu0 0.0
    %114 = vmatprep.subr.mxu0 0.0
    %115 = vmatpush1.msra.mxu0 0.0
    %116 = vmatprep.subr.mxu0 0.0
    %117 = vmatpush1.msra.mxu0 0.0
    %118 = vmatprep.subr.mxu0 0.0
    %119 = vmatpush1.msra.mxu0 0.0
    %120 = vmatprep.subr.mxu0 0.0
    %121 = vmatpush1.msra.mxu0 0.0
    %122 = vmatprep.mubr.f32.mxu0 0.0
    %123 = vmatmul.mubr.f32.gmra.mrb[0].mxu0 %v40
    %v124 = vpop.f32.mrb[0].mxu0
    %v125 = vadd.f32 0.0, %v124
    %v126 = vpop.f32.mrb[0].mxu0
    %127 = vmatprep.mubr.f32.mxu0 0.0
    %128 = vmatmul.mubr.f32.gmra.mrb[0].mxu0 %v41
    %v129 = vpop.f32.mrb[0].mxu0
    %v130 = vadd.f32 0.0, %v129
    %v131 = vpop.f32.mrb[0].mxu0
    %132 = vdwg.mxu0
    %133 = vst [vmem:[#allocation5] sm:$0xff] %v125
    %134 = vst [vmem:[#allocation5 + $0x8] sm:$0xff] %v130
    // Predicated region
    $region14: #{tpu_custom_call.1} parent=1 // pred_check
      _
    $region15: #{tpu_custom_call.1} parent=1 // pred_check_branch
      %136 = sbr.rel (0) target = $region17
    $region16: #{tpu_custom_call.1} parent=1 // pred_region
      %s138 = ssub.s32 256, 256
      %139 = vsyncadd [#allocation4], %s138
      %s140 = sshll.u32 [#allocation5], 4
      %s141 = int_to_ptr.vmem [resolvable:$true] %s140
      %146 = dma.vmem_to_hbm [thread:$0]  %s141, 256, %s2, [#allocation4], 128, 128, 8
    $region17: #{tpu_custom_call.1} parent=1 // pred_fallthru
      _
    // Predicated region
    $region18: #{tpu_custom_call.1} parent=1 // pred_check
      _
    $region19: #{tpu_custom_call.1} parent=1 // pred_check_branch
      %148 = sbr.rel (0) target = $region21
    $region20: #{tpu_custom_call.1} parent=1 // pred_region
      %149 = dma.done [#allocation4], 256
    $region21: #{tpu_custom_call.1} parent=1 // pred_fallthru
      _
    %150 = vsyncpa [#allocation3], 1
    %151 = vsyncpa [#allocation4], 1

</llo_original>
